<compile_context>
chip_gen: v7x
topology: tpu7x:2x2x1
jax: 0.10.0
libtpu: 0.0.40
codegen_flags: <defaults>
</compile_context>

<pallas_src>
import jax
import jax.numpy as jnp
from jax.experimental import pallas as pl
from jax.experimental.pallas import tpu as pltpu


# ---------------------------------------------------------------------------
# Fused kernel: accumulate  y += x_tile @ W_tile  and  G += W_tile^T @ W_tile
# over tiles of the D (input-feature) axis.  W arrives pre-transposed as
# W^T [C, D] so D is the lane axis of both streamed tiles.
# ---------------------------------------------------------------------------
def _fused_fwd_gram_kernel(x_ref, wt_ref, y_ref, g_ref):
    k = pl.program_id(0)

    @pl.when(k == 0)
    def _():
        y_ref[...] = jnp.zeros_like(y_ref)
        g_ref[...] = jnp.zeros_like(g_ref)

    x = x_ref[...]    # [B, tile_d]
    wt = wt_ref[...]  # [C, tile_d]

    # y += x_tile @ W_tile    (contract over the lane-dense tile_d axis)
    y_ref[...] += jax.lax.dot_general(
        x, wt, dimension_numbers=(((1,), (1,)), ((), ())),
        preferred_element_type=jnp.float32)

    # G += W_tile^T @ W_tile  ==  Wt_tile @ Wt_tile^T (contract over tile_d)
    g_ref[...] += jax.lax.dot_general(
        wt, wt, dimension_numbers=(((1,), (1,)), ((), ())),
        preferred_element_type=jnp.float32)


def _round_up(a, m):
    return (a + m - 1) // m * m


def _choose_tile_d(D, B, C, max_tile_bytes=4 * 1024 * 1024):
    """Largest 128-multiple tile along D whose double-buffered f32 x/W tiles
    stay within a conservative VMEM budget (valid on v5e/v6e/v7x)."""
    bytes_per_col = 2 * (B + C) * 4          # double-buffered x + W^T columns
    t = (max_tile_bytes // bytes_per_col) // 128 * 128
    t = max(128, min(2048, t))
    return min(t, _round_up(D, 128))         # single step if D is small


def forward_and_gram(x_flat, wt, *, tile_d):
    """x_flat: [B, D_pad], wt = W^T: [C, D_pad]. Returns (y [B,C], G [C,C])."""
    B, D = x_flat.shape
    C, D2 = wt.shape
    assert D == D2 and D % tile_d == 0
    n_steps = D // tile_d
    return pl.pallas_call(
        _fused_fwd_gram_kernel,
        out_shape=(
            jax.ShapeDtypeStruct((B, C), jnp.float32),
            jax.ShapeDtypeStruct((C, C), jnp.float32),
        ),
        grid_spec=pltpu.PrefetchScalarGridSpec(
            num_scalar_prefetch=0,
            grid=(n_steps,),
            in_specs=[
                pl.BlockSpec((B, tile_d), lambda k: (0, k)),
                pl.BlockSpec((C, tile_d), lambda k: (0, k)),
            ],
            out_specs=(
                pl.BlockSpec((B, C), lambda k: (0, 0)),
                pl.BlockSpec((C, C), lambda k: (0, 0)),
            ),
        ),
        compiler_params=pltpu.CompilerParams(
            dimension_semantics=("arbitrary",),       # D is a reduction axis
            vmem_limit_bytes=32 * 1024 * 1024,        # explicit, fits all gens
        ),
    )(x_flat, wt)


# ---------------------------------------------------------------------------
# JacobianReg.forward equivalent.
# ---------------------------------------------------------------------------
def jacobian_reg(x, w, *, n=1, key=None):
    """Returns (R, y) where R = (1/2) tr |dy/dx|^2 estimate, y = model(x)."""
    assert n == -1 or n > 0
    B = x.shape[0]
    x_flat = x.reshape(B, -1).astype(jnp.float32)
    D, C = w.shape
    assert x_flat.shape[1] == D

    # Pre-transpose once so the large D axis is lane-dense inside the kernel.
    wt = jnp.asarray(w, jnp.float32).T            # [C, D]

    tile_d = _choose_tile_d(D, B, C)
    d_pad = pl.cdiv(D, tile_d) * tile_d
    if d_pad != D:
        x_flat = jnp.pad(x_flat, ((0, 0), (0, d_pad - D)))
        wt = jnp.pad(wt, ((0, 0), (0, d_pad - D)))

    # One pass over W: forward output y and Gram matrix G = W^T W.
    y, G = forward_and_gram(x_flat, wt, tile_d=tile_d)

    # TODO(synk): torch.autograd.grad through an arbitrary user model has no
    # Pallas equivalent; the VJP here is the analytic one (Jv = v @ W^T, i.e.
    # ||Jv||^2 = v G v^T) for the in-script synthetic linear model.
    if n == -1:
        # Exact orthonormal projections e_1..e_C for every batch element:
        #   sum_b sum_i e_i G e_i^T = B * tr(G)
        num_proj = C
        j2_sum = B * jnp.trace(G)
    else:
        num_proj = n
        if C == 1:
            v = jnp.ones((num_proj * B, 1), jnp.float32)
        else:
            if key is None:
                key = jax.random.PRNGKey(0)
            vr = jax.random.normal(key, (num_proj, B, C), dtype=jnp.float32)
            v = (vr / jnp.linalg.norm(vr, axis=-1, keepdims=True)
                 ).reshape(num_proj * B, C)
        # sum_i ||J v_i||^2 = sum_rows (v @ G) * v   — tiny, plain JAX.
        j2_sum = jnp.sum((v @ G) * v)

    J2 = C * j2_sum / (num_proj * B)
    R = 0.5 * J2
    return R, y


if __name__ == "__main__":
    key = jax.random.PRNGKey(0)
    kx, kw, kv = jax.random.split(key, 3)

    B, C_in, H, W_sp = 2, 4, 16, 16
    D = C_in * H * W_sp            # 1024
    C = 32                         # output dimension

    x = jax.random.normal(kx, (B, C_in, H, W_sp), dtype=jnp.float32)
    W = jax.random.normal(kw, (D, C), dtype=jnp.float32) * 0.02

    # n = 1 (default, random projection)
    R1, y1 = jacobian_reg(x, W, n=1, key=kv)
    R1 = jax.block_until_ready(R1)
    y1 = jax.block_until_ready(y1)

    # n = -1 (exact, orthonormal projections)
    R_exact, _ = jacobian_reg(x, W, n=-1)
    R_exact = jax.block_until_ready(R_exact)

    # Plain-JAX references for correctness.
    hi = jax.lax.Precision.HIGHEST
    x_flat = x.reshape(B, -1)
    y_ref = jnp.dot(x_flat, W, precision=hi)
    vr = jax.random.normal(kv, (1, B, C), dtype=jnp.float32)
    v = vr / jnp.linalg.norm(vr, axis=-1, keepdims=True)
    Jv = jnp.dot(v.reshape(B, C), W.T, precision=hi)
    R1_ref = 0.5 * C * jnp.sum(Jv * Jv) / (1 * B)
    R_exact_ref = 0.5 * jnp.sum(W * W)   # exact trace for a linear map

    assert jnp.allclose(y1, y_ref, rtol=1e-4, atol=1e-5)
    assert jnp.allclose(R1, R1_ref, rtol=1e-4, atol=1e-6)
    assert jnp.allclose(R_exact, R_exact_ref, rtol=1e-4, atol=1e-6)

    print("KERNEL_OK")
</pallas_src>

<mosaic_0001>
module attributes {stable_mosaic.version = 11 : i64} {
  func.func @_fused_fwd_gram_kernel(%arg0: i32, %arg1: memref<2x1024xf32, #tpu.memory_space<vmem>>, %arg2: memref<32x1024xf32, #tpu.memory_space<vmem>>, %arg3: memref<2x32xf32, #tpu.memory_space<vmem>>, %arg4: memref<32x32xf32, #tpu.memory_space<vmem>>) attributes {dimension_semantics = [#tpu.dimension_semantics<arbitrary>], iteration_bounds = array<i64: 1>, scalar_prefetch = 0 : i64, scratch_operands = 0 : i64, tpu.core_type = #tpu.core_type<tc>, window_params = [{transform_indices = @transform_0, window_bounds = array<i64: 2, 1024>}, {transform_indices = @transform_1, window_bounds = array<i64: 32, 1024>}, {pipeline_mode = #tpu.pipeline_mode<synchronous>, transform_indices = @transform_2, window_bounds = array<i64: 2, 32>}, {pipeline_mode = #tpu.pipeline_mode<synchronous>, transform_indices = @transform_3, window_bounds = array<i64: 32, 32>}]} {
    %c0_i32 = arith.constant 0 : i32
    %0 = arith.cmpi eq, %arg0, %c0_i32 : i32
    %1 = arith.extui %0 : i1 to i32
    %c0_i32_0 = arith.constant 0 : i32
    %2 = arith.cmpi ne, %1, %c0_i32_0 : i32
    scf.if %2 {
      %cst_13 = arith.constant 0.000000e+00 : f32
      %13 = vector.broadcast %cst_13 : f32 to vector<2x32xf32>
      %c0_14 = arith.constant 0 : index
      %c0_15 = arith.constant 0 : index
      %14 = vector.load %arg3[%c0_14, %c0_15] : memref<2x32xf32, #tpu.memory_space<vmem>>, vector<2x32xf32>
      tpu.vector_store %arg3[%c0_14, %c0_15], %13 {strides = array<i32>} : memref<2x32xf32, #tpu.memory_space<vmem>>, vector<2x32xf32>,
      %cst_16 = arith.constant 0.000000e+00 : f32
      %15 = vector.broadcast %cst_16 : f32 to vector<32x32xf32>
      %c0_17 = arith.constant 0 : index
      %c0_18 = arith.constant 0 : index
      %16 = vector.load %arg4[%c0_17, %c0_18] : memref<32x32xf32, #tpu.memory_space<vmem>>, vector<32x32xf32>
      tpu.vector_store %arg4[%c0_17, %c0_18], %15 {strides = array<i32>} : memref<32x32xf32, #tpu.memory_space<vmem>>, vector<32x32xf32>,
    } else {
    }
    %c0 = arith.constant 0 : index
    %c0_1 = arith.constant 0 : index
    %3 = vector.load %arg1[%c0, %c0_1] : memref<2x1024xf32, #tpu.memory_space<vmem>>, vector<2x1024xf32>
    %c0_2 = arith.constant 0 : index
    %c0_3 = arith.constant 0 : index
    %4 = vector.load %arg2[%c0_2, %c0_3] : memref<32x1024xf32, #tpu.memory_space<vmem>>, vector<32x1024xf32>
    %c0_4 = arith.constant 0 : index
    %c0_5 = arith.constant 0 : index
    %5 = vector.load %arg3[%c0_4, %c0_5] : memref<2x32xf32, #tpu.memory_space<vmem>>, vector<2x32xf32>
    %cst = arith.constant dense<0.000000e+00> : vector<2x32xf32>
    %6 = tpu.matmul %3, %4, %cst {dimension_numbers = #tpu.dot_dimension_numbers<[1], [1], [0], [0], [0, 0, 1, 0], [], []>} : vector<2x1024xf32>, vector<32x1024xf32>, vector<2x32xf32> -> vector<2x32xf32>
    %7 = arith.addf %5, %6 : vector<2x32xf32>
    %c0_6 = arith.constant 0 : index
    %c0_7 = arith.constant 0 : index
    %8 = vector.load %arg3[%c0_6, %c0_7] : memref<2x32xf32, #tpu.memory_space<vmem>>, vector<2x32xf32>
    tpu.vector_store %arg3[%c0_6, %c0_7], %7 {strides = array<i32>} : memref<2x32xf32, #tpu.memory_space<vmem>>, vector<2x32xf32>,
    %c0_8 = arith.constant 0 : index
    %c0_9 = arith.constant 0 : index
    %9 = vector.load %arg4[%c0_8, %c0_9] : memref<32x32xf32, #tpu.memory_space<vmem>>, vector<32x32xf32>
    %cst_10 = arith.constant dense<0.000000e+00> : vector<32x32xf32>
    %10 = tpu.matmul %4, %4, %cst_10 {dimension_numbers = #tpu.dot_dimension_numbers<[1], [1], [0], [0], [0, 0, 1, 0], [], []>} : vector<32x1024xf32>, vector<32x1024xf32>, vector<32x32xf32> -> vector<32x32xf32>
    %11 = arith.addf %9, %10 : vector<32x32xf32>
    %c0_11 = arith.constant 0 : index
    %c0_12 = arith.constant 0 : index
    %12 = vector.load %arg4[%c0_11, %c0_12] : memref<32x32xf32, #tpu.memory_space<vmem>>, vector<32x32xf32>
    tpu.vector_store %arg4[%c0_11, %c0_12], %11 {strides = array<i32>} : memref<32x32xf32, #tpu.memory_space<vmem>>, vector<32x32xf32>,
    return
  }
  func.func @transform_0(%arg0: i32) -> (i32, i32) {
    %c0_i32 = arith.constant 0 : i32
    %c0_i32_0 = arith.constant 0 : i32
    return %c0_i32, %arg0 : i32, i32
  }
  func.func @transform_1(%arg0: i32) -> (i32, i32) {
    %c0_i32 = arith.constant 0 : i32
    %c0_i32_0 = arith.constant 0 : i32
    return %c0_i32, %arg0 : i32, i32
  }
  func.func @transform_2(%arg0: i32) -> (i32, i32) {
    %c0_i32 = arith.constant 0 : i32
    %c0_i32_0 = arith.constant 0 : i32
    %c0_i32_1 = arith.constant 0 : i32
    return %c0_i32, %c0_i32_0 : i32, i32
  }
  func.func @transform_3(%arg0: i32) -> (i32, i32) {
    %c0_i32 = arith.constant 0 : i32
    %c0_i32_0 = arith.constant 0 : i32
    %c0_i32_1 = arith.constant 0 : i32
    return %c0_i32, %c0_i32_0 : i32, i32
  }
}

</mosaic_0001>

<llo_original>
// kernel: tpu_custom_call.1
$region0: #{tpu_custom_call.1}
  #allocation0 [shape = 'u32[]', space=smem, size = 0x4, offset = 0x4, fixed_abs, tag = 'smem constant byte address 0x4 - core index']
  #allocation1 [shape = 'u32[144,128]{1,0:T(1,128)}', space=vmem, size = 0x12000, scoped, tag = 'internal scratch']
  %s0 = inlined_call_operand.hbm [shape: f32[2,1024], index: 0, kind: input, shape index: {}]
  %s1 = inlined_call_operand.hbm [shape: f32[32,1024], index: 1, kind: input, shape index: {}]
  %s2 = inlined_call_operand.hbm [shape: f32[2,32], index: 2, kind: output, shape index: {0}]
  %s3 = inlined_call_operand.hbm [shape: f32[32,32], index: 3, kind: output, shape index: {1}]
  %4 = xla_tuple %s2, %s3
  %s5 = sld [smem:[#allocation0]]
  $region38: #{tpu_custom_call.1} parent=0
    _
  %s7 = ssub.s32 1, %s5
  %s8 = scalar_select 0, %s7, %s5
  $region1: #{tpu_custom_call.1} parent=0
    #allocation2 [shape = 'u8[8192]{0}', space=vmem, size = 0x2000, scoped, tag = 'input window, operand 0, single buffered']
    #allocation3 [shape = 's32[1]{0}', space=sflag, size = 0x4, scoped, tag = 'scoped memory for tpu_custom_call.1']
    #allocation4 [shape = 's32[1]{0}', space=sflag, size = 0x4, scoped, tag = 'scoped memory for tpu_custom_call.1']
    #allocation5 [shape = 'u8[131072]{0}', space=vmem, size = 0x20000, scoped, tag = 'input window, operand 1, single buffered']
    #allocation6 [shape = 's32[1]{0}', space=sflag, size = 0x4, scoped, tag = 'scoped memory for tpu_custom_call.1']
    #allocation7 [shape = 'u8[1024]{0}', space=vmem, size = 0x400, scoped, tag = 'output window, operand 0, single buffered']
    #allocation8 [shape = 'u8[16384]{0}', space=vmem, size = 0x4000, scoped, tag = 'output window, operand 1, single buffered']
    #allocation9 [shape = 's32[1]{0}', space=sflag, size = 0x4, scoped, tag = 'scoped memory for tpu_custom_call.1']
    %9 = vsyncpa [#allocation3], 0
    %10 = vsyncpa [#allocation6], 0
    %11 = vsyncpa [#allocation4], 0
    %12 = vsyncpa [#allocation9], 0
    // Predicated region
    $region2: #{tpu_custom_call.1} parent=1 // pred_check
      _
    $region3: #{tpu_custom_call.1} parent=1 // pred_check_branch
      %14 = sbr.rel (0) target = $region5
    $region4: #{tpu_custom_call.1} parent=1 // pred_region
      %s16 = ssub.s32 256, 256
      %17 = vsyncadd [#allocation3], %s16
      %s19 = sshll.u32 [#allocation2], 4
      %s20 = int_to_ptr.vmem [resolvable:$true] %s19
      %22 = dma.hbm_to_vmem [thread:$0]  %s0, 256, %s20, [#allocation3]
    $region5: #{tpu_custom_call.1} parent=1 // pred_fallthru
      _
    // Predicated region
    $region6: #{tpu_custom_call.1} parent=1 // pred_check
      _
    $region7: #{tpu_custom_call.1} parent=1 // pred_check_branch
      %24 = sbr.rel (0) target = $region9
    $region8: #{tpu_custom_call.1} parent=1 // pred_region
      %s26 = ssub.s32 4096, 4096
      %27 = vsyncadd [#allocation6], %s26
      %s28 = sshll.u32 [#allocation5], 4
      %s29 = int_to_ptr.vmem [resolvable:$true] %s28
      %34 = dma.hbm_to_vmem [thread:$0]  %s1, 4096, %s29, [#allocation6], 1024, 1024, 64
    $region9: #{tpu_custom_call.1} parent=1 // pred_fallthru
      _
    // Predicated region
    $region10: #{tpu_custom_call.1} parent=1 // pred_check
      _
    $region11: #{tpu_custom_call.1} parent=1 // pred_check_branch
      %36 = sbr.rel (0) target = $region13
    $region12: #{tpu_custom_call.1} parent=1 // pred_region
      %37 = dma.done [#allocation3], 256
    $region13: #{tpu_custom_call.1} parent=1 // pred_fallthru
      _
    // Predicated region
    $region14: #{tpu_custom_call.1} parent=1 // pred_check
      _
    $region15: #{tpu_custom_call.1} parent=1 // pred_check_branch
      %39 = sbr.rel (0) target = $region17
    $region16: #{tpu_custom_call.1} parent=1 // pred_region
      %40 = dma.done [#allocation6], 4096
    $region17: #{tpu_custom_call.1} parent=1 // pred_fallthru
      _
    %p41 = scmp.eq.s32.totalorder 0, 0
    // Predicated region
    $region18: #{tpu_custom_call.1} parent=1 // pred_check
      %p42 = pneg %p41
    $region19: #{tpu_custom_call.1} parent=1 // pred_check_branch
      %44 = sbr.rel (%p42) target = $region21
    $region20: #{tpu_custom_call.1} parent=1 // pred_region
      %vm45 = vcmask 254976
      %46 = vst.msk [vmem:[#allocation7] sm:$0x3] %vm45, 0.0
      %vm47 = vcmask 261120
      %48 = vst.msk [vmem:[#allocation8] sm:$0xff] %vm47, 0.0
      %49 = vst.msk [vmem:[#allocation8 + $0x8] sm:$0xff] %vm47, 0.0
      %50 = vst.msk [vmem:[#allocation8 + $0x10] sm:$0xff] %vm47, 0.0
      %51 = vst.msk [vmem:[#allocation8 + $0x18] sm:$0xff] %vm47, 0.0
    $region21: #{tpu_custom_call.1} parent=1 // pred_fallthru
      _
    %v52 = vld [vmem:[#allocation2] sm:$0xff]
    %v53 = vld [vmem:[#allocation2 + $0x8] sm:$0xff]
    %v54 = vld [vmem:[#allocation5] sm:$0xff]
    %v55 = vld [vmem:[#allocation5 + $0x8] sm:$0xff]
    %v56 = vld [vmem:[#allocation5 + $0x10] sm:$0xff]
    %v57 = vld [vmem:[#allocation5 + $0x18] sm:$0xff]
    %v58 = vld [vmem:[#allocation5 + $0x20] sm:$0xff]
    %v59 = vld [vmem:[#allocation5 + $0x28] sm:$0xff]
    %v60 = vld [vmem:[#allocation5 + $0x30] sm:$0xff]
    %v61 = vld [vmem:[#allocation5 + $0x38] sm:$0xff]
    %v62 = vld [vmem:[#allocation5 + $0x40] sm:$0xff]
    %v63 = vld [vmem:[#allocation5 + $0x48] sm:$0xff]
    %v64 = vld [vmem:[#allocation5 + $0x50] sm:$0xff]
    %v65 = vld [vmem:[#allocation5 + $0x58] sm:$0xff]
    %v66 = vld [vmem:[#allocation5 + $0x60] sm:$0xff]
    %v67 = vld [vmem:[#allocation5 + $0x68] sm:$0xff]
    %v68 = vld [vmem:[#allocation5 + $0x70] sm:$0xff]
    %v69 = vld [vmem:[#allocation5 + $0x78] sm:$0xff]
    %v70 = vld [vmem:[#allocation5 + $0x80] sm:$0xff]
    %v71 = vld [vmem:[#allocation5 + $0x88] sm:$0xff]
    %v72 = vld [vmem:[#allocation5 + $0x90] sm:$0xff]
    %v73 = vld [vmem:[#allocation5 + $0x98] sm:$0xff]
    %v74 = vld [vmem:[#allocation5 + $0xa0] sm:$0xff]
    %v75 = vld [vmem:[#allocation5 + $0xa8] sm:$0xff]
    %v76 = vld [vmem:[#allocation5 + $0xb0] sm:$0xff]
    %v77 = vld [vmem:[#allocation5 + $0xb8] sm:$0xff]
    %v78 = vld [vmem:[#allocation5 + $0xc0] sm:$0xff]
    %v79 = vld [vmem:[#allocation5 + $0xc8] sm:$0xff]
    %v80 = vld [vmem:[#allocation5 + $0xd0] sm:$0xff]
    %v81 = vld [vmem:[#allocation5 + $0xd8] sm:$0xff]
    %v82 = vld [vmem:[#allocation5 + $0xe0] sm:$0xff]
    %v83 = vld [vmem:[#allocation5 + $0xe8] sm:$0xff]
    %v84 = vld [vmem:[#allocation5 + $0xf0] sm:$0xff]
    %v85 = vld [vmem:[#allocation5 + $0xf8] sm:$0xff]
    %v86 = vld [vmem:[#allocation7] sm:$0x3]
    %v89 = vcombine.high %v52, %v52
    %v91 = vunpack.c.l.s4 1983009808
    %v92 = vunpack.c.0.s8 %v91
    %v93 = vlaneseq
    %v94 = vshrl.u32 %v93, 7
    %v95 = vsub.s32 %v92, %v94
    %v96 = vrot.slane %v52, %v95
    %v98 = vunpack.c.l.s4 1983009808
    %v99 = vunpack.c.0.s8 %v98
    %v100 = vlaneseq
    %v101 = vshrl.u32 %v100, 7
    %v102 = vsub.s32 %v99, %v101
    %v103 = vrot.slane %v89, %v102
    %v104 = vcombine.high %v96, %v96
    %v105 = vcombine.high %v103, %v103
    %v106 = vcombine.high %v53, %v53
    %v108 = vunpack.c.l.s4 1983009808
    %v109 = vunpack.c.0.s8 %v108
    %v110 = vlaneseq
    %v111 = vshrl.u32 %v110, 7
    %v112 = vsub.s32 %v109, %v111
    %v113 = vrot.slane %v53, %v112
    %v115 = vunpack.c.l.s4 1983009808
    %v116 = vunpack.c.0.s8 %v115
    %v117 = vlaneseq
    %v118 = vshrl.u32 %v117, 7
    %v119 = vsub.s32 %v116, %v118
    %v120 = vrot.slane %v106, %v119
    %v121 = vcombine.high %v113, %v113
    %v122 = vcombine.high %v120, %v120
    %131 = vmatprep.subr.mxu0 %v55
    %132 = vmatpush1.xpose.msra.mxu0 %v54
    %133 = vmatprep.subr.mxu0 %v63
    %134 = vmatpush1.xpose.msra.mxu0 %v62
    %135 = vmatprep.subr.mxu0 %v71
    %136 = vmatpush1.xpose.msra.mxu0 %v70
    %137 = vmatprep.subr.mxu0 %v79
    %138 = vmatpush1.xpose.msra.mxu0 %v78
    %139 = vmatprep.subr.mxu0 0.0
    %140 = vmatpush1.xpose.msra.mxu0 0.0
    %141 = vmatprep.subr.mxu0 0.0
    %142 = vmatpush1.xpose.msra.mxu0 0.0
    %143 = vmatprep.subr.mxu0 0.0
    %144 = vmatpush1.xpose.msra.mxu0 0.0
    %145 = vmatprep.subr.mxu0 0.0
    %146 = vmatpush1.xpose.msra.mxu0 0.0
    %147 = vmatprep.subr.mxu0 0.0
    %148 = vmatpush1.xpose.msra.mxu0 0.0
    %149 = vmatprep.subr.mxu0 0.0
    %150 = vmatpush1.xpose.msra.mxu0 0.0
    %151 = vmatprep.subr.mxu0 0.0
    %152 = vmatpush1.xpose.msra.mxu0 0.0
    %153 = vmatprep.subr.mxu0 0.0
    %154 = vmatpush1.xpose.msra.mxu0 0.0
    %155 = vmatprep.subr.mxu0 0.0
    %156 = vmatpush1.xpose.msra.mxu0 0.0
    %157 = vmatprep.subr.mxu0 0.0
    %158 = vmatpush1.xpose.msra.mxu0 0.0
    %159 = vmatprep.subr.mxu0 0.0
    %160 = vmatpush1.xpose.msra.mxu0 0.0
    %161 = vmatprep.subr.mxu0 0.0
    %162 = vmatpush1.xpose.msra.mxu0 0.0
    %163 = vmatprep.subr.mxu0 0.0
    %164 = vmatpush1.xpose.msra.mxu0 0.0
    %165 = vmatprep.subr.mxu0 0.0
    %166 = vmatpush1.xpose.msra.mxu0 0.0
    %167 = vmatprep.subr.mxu0 0.0
    %168 = vmatpush1.xpose.msra.mxu0 0.0
    %169 = vmatprep.subr.mxu0 0.0
    %170 = vmatpush1.xpose.msra.mxu0 0.0
    %171 = vmatprep.subr.mxu0 0.0
    %172 = vmatpush1.xpose.msra.mxu0 0.0
    %173 = vmatprep.subr.mxu0 0.0
    %174 = vmatpush1.xpose.msra.mxu0 0.0
    %175 = vmatprep.subr.mxu0 0.0
    %176 = vmatpush1.xpose.msra.mxu0 0.0
    %177 = vmatprep.subr.mxu0 0.0
    %178 = vmatpush1.xpose.msra.mxu0 0.0
    %179 = vmatprep.subr.mxu0 0.0
    %180 = vmatpush1.xpose.msra.mxu0 0.0
    %181 = vmatprep.subr.mxu0 0.0
    %182 = vmatpush1.xpose.msra.mxu0 0.0
    %183 = vmatprep.subr.mxu0 0.0
    %184 = vmatpush1.xpose.msra.mxu0 0.0
    %185 = vmatprep.subr.mxu0 0.0
    %186 = vmatpush1.xpose.msra.mxu0 0.0
    %187 = vmatprep.subr.mxu0 0.0
    %188 = vmatpush1.xpose.msra.mxu0 0.0
    %189 = vmatprep.subr.mxu0 0.0
    %190 = vmatpush1.xpose.msra.mxu0 0.0
    %191 = vmatprep.subr.mxu0 0.0
    %192 = vmatpush1.xpose.msra.mxu0 0.0
    %193 = vmatprep.subr.mxu0 0.0
    %194 = vmatpush1.xpose.msra.mxu0 0.0
    %195 = vmatprep.mubr.f32.mxu0 %v104
    %196 = vmatmul.mubr.f32.gmra.mrb[0].mxu0 %v96
    %v197 = vpop.f32.mrb[0].mxu0
    %v198 = vadd.f32 0.0, %v197
    %v199 = vpop.f32.mrb[0].mxu0
    %200 = vdwg.mxu0
    %201 = vmatprep.subr.mxu0 %v57
    %202 = vmatpush1.xpose.msra.mxu0 %v56
    %203 = vmatprep.subr.mxu0 %v65
    %204 = vmatpush1.xpose.msra.mxu0 %v64
    %205 = vmatprep.subr.mxu0 %v73
    %206 = vmatpush1.xpose.msra.mxu0 %v72
    %207 = vmatprep.subr.mxu0 %v81
    %208 = vmatpush1.xpose.msra.mxu0 %v80
    %209 = vmatprep.subr.mxu0 0.0
    %210 = vmatpush1.xpose.msra.mxu0 0.0
    %211 = vmatprep.subr.mxu0 0.0
    %212 = vmatpush1.xpose.msra.mxu0 0.0
    %213 = vmatprep.subr.mxu0 0.0
    %214 = vmatpush1.xpose.msra.mxu0 0.0
    %215 = vmatprep.subr.mxu0 0.0
    %216 = vmatpush1.xpose.msra.mxu0 0.0
    %217 = vmatprep.subr.mxu0 0.0
    %218 = vmatpush1.xpose.msra.mxu0 0.0
    %219 = vmatprep.subr.mxu0 0.0
    %220 = vmatpush1.xpose.msra.mxu0 0.0
    %221 = vmatprep.subr.mxu0 0.0
    %222 = vmatpush1.xpose.msra.mxu0 0.0
    %223 = vmatprep.subr.mxu0 0.0
    %224 = vmatpush1.xpose.msra.mxu0 0.0
    %225 = vmatprep.subr.mxu0 0.0
    %226 = vmatpush1.xpose.msra.mxu0 0.0
    %227 = vmatprep.subr.mxu0 0.0
    %228 = vmatpush1.xpose.msra.mxu0 0.0
    %229 = vmatprep.subr.mxu0 0.0
    %230 = vmatpush1.xpose.msra.mxu0 0.0
    %231 = vmatprep.subr.mxu0 0.0
    %232 = vmatpush1.xpose.msra.mxu0 0.0
    %233 = vmatprep.subr.mxu0 0.0
    %234 = vmatpush1.xpose.msra.mxu0 0.0
    %235 = vmatprep.subr.mxu0 0.0
    %236 = vmatpush1.xpose.msra.mxu0 0.0
    %237 = vmatprep.subr.mxu0 0.0
    %238 = vmatpush1.xpose.msra.mxu0 0.0
    %239 = vmatprep.subr.mxu0 0.0
    %240 = vmatpush1.xpose.msra.mxu0 0.0
    %241 = vmatprep.subr.mxu0 0.0
    %242 = vmatpush1.xpose.msra.mxu0 0.0
    %243 = vmatprep.subr.mxu0 0.0
    %244 = vmatpush1.xpose.msra.mxu0 0.0
    %245 = vmatprep.subr.mxu0 0.0
    %246 = vmatpush1.xpose.msra.mxu0 0.0
    %247 = vmatprep.subr.mxu0 0.0
    %248 = vmatpush1.xpose.msra.mxu0 0.0
    %249 = vmatprep.subr.mxu0 0.0
    %250 = vmatpush1.xpose.msra.mxu0 0.0
    %251 = vmatprep.subr.mxu0 0.0
    %252 = vmatpush1.xpose.msra.mxu0 0.0
    %253 = vmatprep.subr.mxu0 0.0
    %254 = vmatpush1.xpose.msra.mxu0 0.0
    %255 = vmatprep.subr.mxu0 0.0
    %256 = vmatpush1.xpose.msra.mxu0 0.0
    %257 = vmatprep.subr.mxu0 0.0
    %258 = vmatpush1.xpose.msra.mxu0 0.0
    %259 = vmatprep.subr.mxu0 0.0
    %260 = vmatpush1.xpose.msra.mxu0 0.0
    %261 = vmatprep.subr.mxu0 0.0
    %262 = vmatpush1.xpose.msra.mxu0 0.0
    %263 = vmatprep.subr.mxu0 0.0
    %264 = vmatpush1.xpose.msra.mxu0 0.0
    %265 = vmatprep.mubr.f32.mxu0 %v105
    %266 = vmatmul.mubr.f32.gmra.mrb[0].mxu0 %v103
    %v267 = vpop.f32.mrb[0].mxu0
    %v268 = vadd.f32 %v198, %v267
    %v269 = vpop.f32.mrb[0].mxu0
    %270 = vdwg.mxu0
    %271 = vmatprep.subr.mxu0 %v59
    %272 = vmatpush1.xpose.msra.mxu0 %v58
    %273 = vmatprep.subr.mxu0 %v67
    %274 = vmatpush1.xpose.msra.mxu0 %v66
    %275 = vmatprep.subr.mxu0 %v75
    %276 = vmatpush1.xpose.msra.mxu0 %v74
    %277 = vmatprep.subr.mxu0 %v83
    %278 = vmatpush1.xpose.msra.mxu0 %v82
    %279 = vmatprep.subr.mxu0 0.0
    %280 = vmatpush1.xpose.msra.mxu0 0.0
    %281 = vmatprep.subr.mxu0 0.0
    %282 = vmatpush1.xpose.msra.mxu0 0.0
    %283 = vmatprep.subr.mxu0 0.0
    %284 = vmatpush1.xpose.msra.mxu0 0.0
    %285 = vmatprep.subr.mxu0 0.0
    %286 = vmatpush1.xpose.msra.mxu0 0.0
    %287 = vmatprep.subr.mxu0 0.0
    %288 = vmatpush1.xpose.msra.mxu0 0.0
    %289 = vmatprep.subr.mxu0 0.0
    %290 = vmatpush1.xpose.msra.mxu0 0.0
    %291 = vmatprep.subr.mxu0 0.0
    %292 = vmatpush1.xpose.msra.mxu0 0.0
    %293 = vmatprep.subr.mxu0 0.0
    %294 = vmatpush1.xpose.msra.mxu0 0.0
    %295 = vmatprep.subr.mxu0 0.0
    %296 = vmatpush1.xpose.msra.mxu0 0.0
    %297 = vmatprep.subr.mxu0 0.0
    %298 = vmatpush1.xpose.msra.mxu0 0.0
    %299 = vmatprep.subr.mxu0 0.0
    %300 = vmatpush1.xpose.msra.mxu0 0.0
    %301 = vmatprep.subr.mxu0 0.0
    %302 = vmatpush1.xpose.msra.mxu0 0.0
    %303 = vmatprep.subr.mxu0 0.0
    %304 = vmatpush1.xpose.msra.mxu0 0.0
    %305 = vmatprep.subr.mxu0 0.0
    %306 = vmatpush1.xpose.msra.mxu0 0.0
    %307 = vmatprep.subr.mxu0 0.0
    %308 = vmatpush1.xpose.msra.mxu0 0.0
    %309 = vmatprep.subr.mxu0 0.0
    %310 = vmatpush1.xpose.msra.mxu0 0.0
    %311 = vmatprep.subr.mxu0 0.0
    %312 = vmatpush1.xpose.msra.mxu0 0.0
    %313 = vmatprep.subr.mxu0 0.0
    %314 = vmatpush1.xpose.msra.mxu0 0.0
    %315 = vmatprep.subr.mxu0 0.0
    %316 = vmatpush1.xpose.msra.mxu0 0.0
    %317 = vmatprep.subr.mxu0 0.0
    %318 = vmatpush1.xpose.msra.mxu0 0.0
    %319 = vmatprep.subr.mxu0 0.0
    %320 = vmatpush1.xpose.msra.mxu0 0.0
    %321 = vmatprep.subr.mxu0 0.0
    %322 = vmatpush1.xpose.msra.mxu0 0.0
    %323 = vmatprep.subr.mxu0 0.0
    %324 = vmatpush1.xpose.msra.mxu0 0.0
    %325 = vmatprep.subr.mxu0 0.0
    %326 = vmatpush1.xpose.msra.mxu0 0.0
    %327 = vmatprep.subr.mxu0 0.0
    %328 = vmatpush1.xpose.msra.mxu0 0.0
    %329 = vmatprep.subr.mxu0 0.0
    %330 = vmatpush1.xpose.msra.mxu0 0.0
    %331 = vmatprep.subr.mxu0 0.0
    %332 = vmatpush1.xpose.msra.mxu0 0.0
    %333 = vmatprep.subr.mxu0 0.0
    %334 = vmatpush1.xpose.msra.mxu0 0.0
    %335 = vmatprep.mubr.f32.mxu0 %v121
    %336 = vmatmul.mubr.f32.gmra.mrb[0].mxu0 %v113
    %v337 = vpop.f32.mrb[0].mxu0
    %v338 = vadd.f32 %v268, %v337
    %v339 = vpop.f32.mrb[0].mxu0
    %340 = vdwg.mxu0
    %341 = vmatprep.subr.mxu0 %v61
    %342 = vmatpush1.xpose.msra.mxu0 %v60
    %343 = vmatprep.subr.mxu0 %v69
    %344 = vmatpush1.xpose.msra.mxu0 %v68
    %345 = vmatprep.subr.mxu0 %v77
    %346 = vmatpush1.xpose.msra.mxu0 %v76
    %347 = vmatprep.subr.mxu0 %v85
    %348 = vmatpush1.xpose.msra.mxu0 %v84
    %349 = vmatprep.subr.mxu0 0.0
    %350 = vmatpush1.xpose.msra.mxu0 0.0
    %351 = vmatprep.subr.mxu0 0.0
    %352 = vmatpush1.xpose.msra.mxu0 0.0
    %353 = vmatprep.subr.mxu0 0.0
    %354 = vmatpush1.xpose.msra.mxu0 0.0
    %355 = vmatprep.subr.mxu0 0.0
    %356 = vmatpush1.xpose.msra.mxu0 0.0
    %357 = vmatprep.subr.mxu0 0.0
    %358 = vmatpush1.xpose.msra.mxu0 0.0
    %359 = vmatprep.subr.mxu0 0.0
    %360 = vmatpush1.xpose.msra.mxu0 0.0
    %361 = vmatprep.subr.mxu0 0.0
    %362 = vmatpush1.xpose.msra.mxu0 0.0
    %363 = vmatprep.subr.mxu0 0.0
    %364 = vmatpush1.xpose.msra.mxu0 0.0
    %365 = vmatprep.subr.mxu0 0.0
    %366 = vmatpush1.xpose.msra.mxu0 0.0
    %367 = vmatprep.subr.mxu0 0.0
    %368 = vmatpush1.xpose.msra.mxu0 0.0
    %369 = vmatprep.subr.mxu0 0.0
    %370 = vmatpush1.xpose.msra.mxu0 0.0
    %371 = vmatprep.subr.mxu0 0.0
    %372 = vmatpush1.xpose.msra.mxu0 0.0
    %373 = vmatprep.subr.mxu0 0.0
    %374 = vmatpush1.xpose.msra.mxu0 0.0
    %375 = vmatprep.subr.mxu0 0.0
    %376 = vmatpush1.xpose.msra.mxu0 0.0
    %377 = vmatprep.subr.mxu0 0.0
    %378 = vmatpush1.xpose.msra.mxu0 0.0
    %379 = vmatprep.subr.mxu0 0.0
    %380 = vmatpush1.xpose.msra.mxu0 0.0
    %381 = vmatprep.subr.mxu0 0.0
    %382 = vmatpush1.xpose.msra.mxu0 0.0
    %383 = vmatprep.subr.mxu0 0.0
    %384 = vmatpush1.xpose.msra.mxu0 0.0
    %385 = vmatprep.subr.mxu0 0.0
    %386 = vmatpush1.xpose.msra.mxu0 0.0
    %387 = vmatprep.subr.mxu0 0.0
    %388 = vmatpush1.xpose.msra.mxu0 0.0
    %389 = vmatprep.subr.mxu0 0.0
    %390 = vmatpush1.xpose.msra.mxu0 0.0
    %391 = vmatprep.subr.mxu0 0.0
    %392 = vmatpush1.xpose.msra.mxu0 0.0
    %393 = vmatprep.subr.mxu0 0.0
    %394 = vmatpush1.xpose.msra.mxu0 0.0
    %395 = vmatprep.subr.mxu0 0.0
    %396 = vmatpush1.xpose.msra.mxu0 0.0
    %397 = vmatprep.subr.mxu0 0.0
    %398 = vmatpush1.xpose.msra.mxu0 0.0
    %399 = vmatprep.subr.mxu0 0.0
    %400 = vmatpush1.xpose.msra.mxu0 0.0
    %401 = vmatprep.subr.mxu0 0.0
    %402 = vmatpush1.xpose.msra.mxu0 0.0
    %403 = vmatprep.subr.mxu0 0.0
    %404 = vmatpush1.xpose.msra.mxu0 0.0
    %405 = vmatprep.mubr.f32.mxu0 %v122
    %406 = vmatmul.mubr.f32.gmra.mrb[0].mxu0 %v120
    %v407 = vpop.f32.mrb[0].mxu0
    %v408 = vadd.f32 %v338, %v407
    %v409 = vpop.f32.mrb[0].mxu0
    %410 = vdwg.mxu0
    %v411 = vadd.f32 %v86, %v408
    %vm412 = vcmask 254976
    %413 = vst.msk [vmem:[#allocation7] sm:$0x3] %vm412, %v411
    %v414 = vld [vmem:[#allocation8] sm:$0xff]
    %v415 = vld [vmem:[#allocation8 + $0x8] sm:$0xff]
    %v416 = vld [vmem:[#allocation8 + $0x10] sm:$0xff]
    %v417 = vld [vmem:[#allocation8 + $0x18] sm:$0xff]
    %418 = vmatprep.subr.mxu0 %v55
    %419 = vmatpush1.xpose.msra.mxu0 %v54
    %420 = vmatprep.subr.mxu0 %v63
    %421 = vmatpush1.xpose.msra.mxu0 %v62
    %422 = vmatprep.subr.mxu0 %v71
    %423 = vmatpush1.xpose.msra.mxu0 %v70
    %424 = vmatprep.subr.mxu0 %v79
    %425 = vmatpush1.xpose.msra.mxu0 %v78
    %426 = vmatprep.subr.mxu0 0.0
    %427 = vmatpush1.xpose.msra.mxu0 0.0
    %428 = vmatprep.subr.mxu0 0.0
    %429 = vmatpush1.xpose.msra.mxu0 0.0
    %430 = vmatprep.subr.mxu0 0.0
    %431 = vmatpush1.xpose.msra.mxu0 0.0
    %432 = vmatprep.subr.mxu0 0.0
    %433 = vmatpush1.xpose.msra.mxu0 0.0
    %434 = vmatprep.subr.mxu0 0.0
    %435 = vmatpush1.xpose.msra.mxu0 0.0
    %436 = vmatprep.subr.mxu0 0.0
    %437 = vmatpush1.xpose.msra.mxu0 0.0
    %438 = vmatprep.subr.mxu0 0.0
    %439 = vmatpush1.xpose.msra.mxu0 0.0
    %440 = vmatprep.subr.mxu0 0.0
    %441 = vmatpush1.xpose.msra.mxu0 0.0
    %442 = vmatprep.subr.mxu0 0.0
    %443 = vmatpush1.xpose.msra.mxu0 0.0
    %444 = vmatprep.subr.mxu0 0.0
    %445 = vmatpush1.xpose.msra.mxu0 0.0
    %446 = vmatprep.subr.mxu0 0.0
    %447 = vmatpush1.xpose.msra.mxu0 0.0
    %448 = vmatprep.subr.mxu0 0.0
    %449 = vmatpush1.xpose.msra.mxu0 0.0
    %450 = vmatprep.subr.mxu0 0.0
    %451 = vmatpush1.xpose.msra.mxu0 0.0
    %452 = vmatprep.subr.mxu0 0.0
    %453 = vmatpush1.xpose.msra.mxu0 0.0
    %454 = vmatprep.subr.mxu0 0.0
    %455 = vmatpush1.xpose.msra.mxu0 0.0
    %456 = vmatprep.subr.mxu0 0.0
    %457 = vmatpush1.xpose.msra.mxu0 0.0
    %458 = vmatprep.subr.mxu0 0.0
    %459 = vmatpush1.xpose.msra.mxu0 0.0
    %460 = vmatprep.subr.mxu0 0.0
    %461 = vmatpush1.xpose.msra.mxu0 0.0
    %462 = vmatprep.subr.mxu0 0.0
    %463 = vmatpush1.xpose.msra.mxu0 0.0
    %464 = vmatprep.subr.mxu0 0.0
    %465 = vmatpush1.xpose.msra.mxu0 0.0
    %466 = vmatprep.subr.mxu0 0.0
    %467 = vmatpush1.xpose.msra.mxu0 0.0
    %468 = vmatprep.subr.mxu0 0.0
    %469 = vmatpush1.xpose.msra.mxu0 0.0
    %470 = vmatprep.subr.mxu0 0.0
    %471 = vmatpush1.xpose.msra.mxu0 0.0
    %472 = vmatprep.subr.mxu0 0.0
    %473 = vmatpush1.xpose.msra.mxu0 0.0
    %474 = vmatprep.subr.mxu0 0.0
    %475 = vmatpush1.xpose.msra.mxu0 0.0
    %476 = vmatprep.subr.mxu0 0.0
    %477 = vmatpush1.xpose.msra.mxu0 0.0
    %478 = vmatprep.subr.mxu0 0.0
    %479 = vmatpush1.xpose.msra.mxu0 0.0
    %480 = vmatprep.subr.mxu0 0.0
    %481 = vmatpush1.xpose.msra.mxu0 0.0
    %482 = vmatprep.mubr.f32.mxu0 %v55
    %483 = vmatmul.mubr.f32.gmra.mrb[0].mxu0 %v54
    %v484 = vpop.f32.mrb[0].mxu0
    %v485 = vadd.f32 0.0, %v484
    %v486 = vpop.f32.mrb[0].mxu0
    %487 = vmatprep.mubr.f32.mxu0 %v63
    %488 = vmatmul.mubr.f32.gmra.mrb[0].mxu0 %v62
    %v489 = vpop.f32.mrb[0].mxu0
    %v490 = vadd.f32 0.0, %v489
    %v491 = vpop.f32.mrb[0].mxu0
    %492 = vmatprep.mubr.f32.mxu0 %v71
    %493 = vmatmul.mubr.f32.gmra.mrb[0].mxu0 %v70
    %v494 = vpop.f32.mrb[0].mxu0
    %v495 = vadd.f32 0.0, %v494
    %v496 = vpop.f32.mrb[0].mxu0
    %497 = vmatprep.mubr.f32.mxu0 %v79
    %498 = vmatmul.mubr.f32.gmra.mrb[0].mxu0 %v78
    %v499 = vpop.f32.mrb[0].mxu0
    %v500 = vadd.f32 0.0, %v499
    %v501 = vpop.f32.mrb[0].mxu0
    %502 = vdwg.mxu0
    %503 = vmatprep.subr.mxu0 %v57
    %504 = vmatpush1.xpose.msra.mxu0 %v56
    %505 = vmatprep.subr.mxu0 %v65
    %506 = vmatpush1.xpose.msra.mxu0 %v64
    %507 = vmatprep.subr.mxu0 %v73
    %508 = vmatpush1.xpose.msra.mxu0 %v72
    %509 = vmatprep.subr.mxu0 %v81
    %510 = vmatpush1.xpose.msra.mxu0 %v80
    %511 = vmatprep.subr.mxu0 0.0
    %512 = vmatpush1.xpose.msra.mxu0 0.0
    %513 = vmatprep.subr.mxu0 0.0
    %514 = vmatpush1.xpose.msra.mxu0 0.0
    %515 = vmatprep.subr.mxu0 0.0
    %516 = vmatpush1.xpose.msra.mxu0 0.0
    %517 = vmatprep.subr.mxu0 0.0
    %518 = vmatpush1.xpose.msra.mxu0 0.0
    %519 = vmatprep.subr.mxu0 0.0
    %520 = vmatpush1.xpose.msra.mxu0 0.0
    %521 = vmatprep.subr.mxu0 0.0
    %522 = vmatpush1.xpose.msra.mxu0 0.0
    %523 = vmatprep.subr.mxu0 0.0
    %524 = vmatpush1.xpose.msra.mxu0 0.0
    %525 = vmatprep.subr.mxu0 0.0
    %526 = vmatpush1.xpose.msra.mxu0 0.0
    %527 = vmatprep.subr.mxu0 0.0
    %528 = vmatpush1.xpose.msra.mxu0 0.0
    %529 = vmatprep.subr.mxu0 0.0
    %530 = vmatpush1.xpose.msra.mxu0 0.0
    %531 = vmatprep.subr.mxu0 0.0
    %532 = vmatpush1.xpose.msra.mxu0 0.0
    %533 = vmatprep.subr.mxu0 0.0
    %534 = vmatpush1.xpose.msra.mxu0 0.0
    %535 = vmatprep.subr.mxu0 0.0
    %536 = vmatpush1.xpose.msra.mxu0 0.0
    %537 = vmatprep.subr.mxu0 0.0
    %538 = vmatpush1.xpose.msra.mxu0 0.0
    %539 = vmatprep.subr.mxu0 0.0
    %540 = vmatpush1.xpose.msra.mxu0 0.0
    %541 = vmatprep.subr.mxu0 0.0
    %542 = vmatpush1.xpose.msra.mxu0 0.0
    %543 = vmatprep.subr.mxu0 0.0
    %544 = vmatpush1.xpose.msra.mxu0 0.0
    %545 = vmatprep.subr.mxu0 0.0
    %546 = vmatpush1.xpose.msra.mxu0 0.0
    %547 = vmatprep.subr.mxu0 0.0
    %548 = vmatpush1.xpose.msra.mxu0 0.0
    %549 = vmatprep.subr.mxu0 0.0
    %550 = vmatpush1.xpose.msra.mxu0 0.0
    %551 = vmatprep.subr.mxu0 0.0
    %552 = vmatpush1.xpose.msra.mxu0 0.0
    %553 = vmatprep.subr.mxu0 0.0
    %554 = vmatpush1.xpose.msra.mxu0 0.0
    %555 = vmatprep.subr.mxu0 0.0
    %556 = vmatpush1.xpose.msra.mxu0 0.0
    %557 = vmatprep.subr.mxu0 0.0
    %558 = vmatpush1.xpose.msra.mxu0 0.0
    %559 = vmatprep.subr.mxu0 0.0
    %560 = vmatpush1.xpose.msra.mxu0 0.0
    %561 = vmatprep.subr.mxu0 0.0
    %562 = vmatpush1.xpose.msra.mxu0 0.0
    %563 = vmatprep.subr.mxu0 0.0
    %564 = vmatpush1.xpose.msra.mxu0 0.0
    %565 = vmatprep.subr.mxu0 0.0
    %566 = vmatpush1.xpose.msra.mxu0 0.0
    %567 = vmatprep.mubr.f32.mxu0 %v57
    %568 = vmatmul.mubr.f32.gmra.mrb[0].mxu0 %v56
    %v569 = vpop.f32.mrb[0].mxu0
    %v570 = vadd.f32 %v485, %v569
    %v571 = vpop.f32.mrb[0].mxu0
    %572 = vmatprep.mubr.f32.mxu0 %v65
    %573 = vmatmul.mubr.f32.gmra.mrb[0].mxu0 %v64
    %v574 = vpop.f32.mrb[0].mxu0
    %v575 = vadd.f32 %v490, %v574
    %v576 = vpop.f32.mrb[0].mxu0
    %577 = vmatprep.mubr.f32.mxu0 %v73
    %578 = vmatmul.mubr.f32.gmra.mrb[0].mxu0 %v72
    %v579 = vpop.f32.mrb[0].mxu0
    %v580 = vadd.f32 %v495, %v579
    %v581 = vpop.f32.mrb[0].mxu0
    %582 = vmatprep.mubr.f32.mxu0 %v81
    %583 = vmatmul.mubr.f32.gmra.mrb[0].mxu0 %v80
    %v584 = vpop.f32.mrb[0].mxu0
    %v585 = vadd.f32 %v500, %v584
    %v586 = vpop.f32.mrb[0].mxu0
    %587 = vdwg.mxu0
    %588 = vmatprep.subr.mxu0 %v59
    %589 = vmatpush1.xpose.msra.mxu0 %v58
    %590 = vmatprep.subr.mxu0 %v67
    %591 = vmatpush1.xpose.msra.mxu0 %v66
    %592 = vmatprep.subr.mxu0 %v75
    %593 = vmatpush1.xpose.msra.mxu0 %v74
    %594 = vmatprep.subr.mxu0 %v83
    %595 = vmatpush1.xpose.msra.mxu0 %v82
    %596 = vmatprep.subr.mxu0 0.0
    %597 = vmatpush1.xpose.msra.mxu0 0.0
    %598 = vmatprep.subr.mxu0 0.0
    %599 = vmatpush1.xpose.msra.mxu0 0.0
    %600 = vmatprep.subr.mxu0 0.0
    %601 = vmatpush1.xpose.msra.mxu0 0.0
    %602 = vmatprep.subr.mxu0 0.0
    %603 = vmatpush1.xpose.msra.mxu0 0.0
    %604 = vmatprep.subr.mxu0 0.0
    %605 = vmatpush1.xpose.msra.mxu0 0.0
    %606 = vmatprep.subr.mxu0 0.0
    %607 = vmatpush1.xpose.msra.mxu0 0.0
    %608 = vmatprep.subr.mxu0 0.0
    %609 = vmatpush1.xpose.msra.mxu0 0.0
    %610 = vmatprep.subr.mxu0 0.0
    %611 = vmatpush1.xpose.msra.mxu0 0.0
    %612 = vmatprep.subr.mxu0 0.0
    %613 = vmatpush1.xpose.msra.mxu0 0.0
    %614 = vmatprep.subr.mxu0 0.0
    %615 = vmatpush1.xpose.msra.mxu0 0.0
    %616 = vmatprep.subr.mxu0 0.0
    %617 = vmatpush1.xpose.msra.mxu0 0.0
    %618 = vmatprep.subr.mxu0 0.0
    %619 = vmatpush1.xpose.msra.mxu0 0.0
    %620 = vmatprep.subr.mxu0 0.0
    %621 = vmatpush1.xpose.msra.mxu0 0.0
    %622 = vmatprep.subr.mxu0 0.0
    %623 = vmatpush1.xpose.msra.mxu0 0.0
    %624 = vmatprep.subr.mxu0 0.0
    %625 = vmatpush1.xpose.msra.mxu0 0.0
    %626 = vmatprep.subr.mxu0 0.0
    %627 = vmatpush1.xpose.msra.mxu0 0.0
    %628 = vmatprep.subr.mxu0 0.0
    %629 = vmatpush1.xpose.msra.mxu0 0.0
    %630 = vmatprep.subr.mxu0 0.0
    %631 = vmatpush1.xpose.msra.mxu0 0.0
    %632 = vmatprep.subr.mxu0 0.0
    %633 = vmatpush1.xpose.msra.mxu0 0.0
    %634 = vmatprep.subr.mxu0 0.0
    %635 = vmatpush1.xpose.msra.mxu0 0.0
    %636 = vmatprep.subr.mxu0 0.0
    %637 = vmatpush1.xpose.msra.mxu0 0.0
    %638 = vmatprep.subr.mxu0 0.0
    %639 = vmatpush1.xpose.msra.mxu0 0.0
    %640 = vmatprep.subr.mxu0 0.0
    %641 = vmatpush1.xpose.msra.mxu0 0.0
    %642 = vmatprep.subr.mxu0 0.0
    %643 = vmatpush1.xpose.msra.mxu0 0.0
    %644 = vmatprep.subr.mxu0 0.0
    %645 = vmatpush1.xpose.msra.mxu0 0.0
    %646 = vmatprep.subr.mxu0 0.0
    %647 = vmatpush1.xpose.msra.mxu0 0.0
    %648 = vmatprep.subr.mxu0 0.0
    %649 = vmatpush1.xpose.msra.mxu0 0.0
    %650 = vmatprep.subr.mxu0 0.0
    %651 = vmatpush1.xpose.msra.mxu0 0.0
    %652 = vmatprep.mubr.f32.mxu0 %v59
    %653 = vmatmul.mubr.f32.gmra.mrb[0].mxu0 %v58
    %v654 = vpop.f32.mrb[0].mxu0
    %v655 = vadd.f32 %v570, %v654
    %v656 = vpop.f32.mrb[0].mxu0
    %657 = vmatprep.mubr.f32.mxu0 %v67
    %658 = vmatmul.mubr.f32.gmra.mrb[0].mxu0 %v66
    %v659 = vpop.f32.mrb[0].mxu0
    %v660 = vadd.f32 %v575, %v659
    %v661 = vpop.f32.mrb[0].mxu0
    %662 = vmatprep.mubr.f32.mxu0 %v75
    %663 = vmatmul.mubr.f32.gmra.mrb[0].mxu0 %v74
    %v664 = vpop.f32.mrb[0].mxu0
    %v665 = vadd.f32 %v580, %v664
    %v666 = vpop.f32.mrb[0].mxu0
    %667 = vmatprep.mubr.f32.mxu0 %v83
    %668 = vmatmul.mubr.f32.gmra.mrb[0].mxu0 %v82
    %v669 = vpop.f32.mrb[0].mxu0
    %v670 = vadd.f32 %v585, %v669
    %v671 = vpop.f32.mrb[0].mxu0
    %672 = vdwg.mxu0
    %673 = vmatprep.subr.mxu0 %v61
    %674 = vmatpush1.xpose.msra.mxu0 %v60
    %675 = vmatprep.subr.mxu0 %v69
    %676 = vmatpush1.xpose.msra.mxu0 %v68
    %677 = vmatprep.subr.mxu0 %v77
    %678 = vmatpush1.xpose.msra.mxu0 %v76
    %679 = vmatprep.subr.mxu0 %v85
    %680 = vmatpush1.xpose.msra.mxu0 %v84
    %681 = vmatprep.subr.mxu0 0.0
    %682 = vmatpush1.xpose.msra.mxu0 0.0
    %683 = vmatprep.subr.mxu0 0.0
    %684 = vmatpush1.xpose.msra.mxu0 0.0
    %685 = vmatprep.subr.mxu0 0.0
    %686 = vmatpush1.xpose.msra.mxu0 0.0
    %687 = vmatprep.subr.mxu0 0.0
    %688 = vmatpush1.xpose.msra.mxu0 0.0
    %689 = vmatprep.subr.mxu0 0.0
    %690 = vmatpush1.xpose.msra.mxu0 0.0
    %691 = vmatprep.subr.mxu0 0.0
    %692 = vmatpush1.xpose.msra.mxu0 0.0
    %693 = vmatprep.subr.mxu0 0.0
    %694 = vmatpush1.xpose.msra.mxu0 0.0
    %695 = vmatprep.subr.mxu0 0.0
    %696 = vmatpush1.xpose.msra.mxu0 0.0
    %697 = vmatprep.subr.mxu0 0.0
    %698 = vmatpush1.xpose.msra.mxu0 0.0
    %699 = vmatprep.subr.mxu0 0.0
    %700 = vmatpush1.xpose.msra.mxu0 0.0
    %701 = vmatprep.subr.mxu0 0.0
    %702 = vmatpush1.xpose.msra.mxu0 0.0
    %703 = vmatprep.subr.mxu0 0.0
    %704 = vmatpush1.xpose.msra.mxu0 0.0
    %705 = vmatprep.subr.mxu0 0.0
    %706 = vmatpush1.xpose.msra.mxu0 0.0
    %707 = vmatprep.subr.mxu0 0.0
    %708 = vmatpush1.xpose.msra.mxu0 0.0
    %709 = vmatprep.subr.mxu0 0.0
    %710 = vmatpush1.xpose.msra.mxu0 0.0
    %711 = vmatprep.subr.mxu0 0.0
    %712 = vmatpush1.xpose.msra.mxu0 0.0
    %713 = vmatprep.subr.mxu0 0.0
    %714 = vmatpush1.xpose.msra.mxu0 0.0
    %715 = vmatprep.subr.mxu0 0.0
    %716 = vmatpush1.xpose.msra.mxu0 0.0
    %717 = vmatprep.subr.mxu0 0.0
    %718 = vmatpush1.xpose.msra.mxu0 0.0
    %719 = vmatprep.subr.mxu0 0.0
    %720 = vmatpush1.xpose.msra.mxu0 0.0
    %721 = vmatprep.subr.mxu0 0.0
    %722 = vmatpush1.xpose.msra.mxu0 0.0
    %723 = vmatprep.subr.mxu0 0.0
    %724 = vmatpush1.xpose.msra.mxu0 0.0
    %725 = vmatprep.subr.mxu0 0.0
    %726 = vmatpush1.xpose.msra.mxu0 0.0
    %727 = vmatprep.subr.mxu0 0.0
    %728 = vmatpush1.xpose.msra.mxu0 0.0
    %729 = vmatprep.subr.mxu0 0.0
    %730 = vmatpush1.xpose.msra.mxu0 0.0
    %731 = vmatprep.subr.mxu0 0.0
    %732 = vmatpush1.xpose.msra.mxu0 0.0
    %733 = vmatprep.subr.mxu0 0.0
    %734 = vmatpush1.xpose.msra.mxu0 0.0
    %735 = vmatprep.subr.mxu0 0.0
    %736 = vmatpush1.xpose.msra.mxu0 0.0
    %737 = vmatprep.mubr.f32.mxu0 %v61
    %738 = vmatmul.mubr.f32.gmra.mrb[0].mxu0 %v60
    %v739 = vpop.f32.mrb[0].mxu0
    %v740 = vadd.f32 %v655, %v739
    %v741 = vpop.f32.mrb[0].mxu0
    %742 = vmatprep.mubr.f32.mxu0 %v69
    %743 = vmatmul.mubr.f32.gmra.mrb[0].mxu0 %v68
    %v744 = vpop.f32.mrb[0].mxu0
    %v745 = vadd.f32 %v660, %v744
    %v746 = vpop.f32.mrb[0].mxu0
    %747 = vmatprep.mubr.f32.mxu0 %v77
    %748 = vmatmul.mubr.f32.gmra.mrb[0].mxu0 %v76
    %v749 = vpop.f32.mrb[0].mxu0
    %v750 = vadd.f32 %v665, %v749
    %v751 = vpop.f32.mrb[0].mxu0
    %752 = vmatprep.mubr.f32.mxu0 %v85
    %753 = vmatmul.mubr.f32.gmra.mrb[0].mxu0 %v84
    %v754 = vpop.f32.mrb[0].mxu0
    %v755 = vadd.f32 %v670, %v754
    %v756 = vpop.f32.mrb[0].mxu0
    %757 = vdwg.mxu0
    %v758 = vadd.f32 %v414, %v740
    %v759 = vadd.f32 %v415, %v745
    %v760 = vadd.f32 %v416, %v750
    %v761 = vadd.f32 %v417, %v755
    %vm762 = vcmask 261120
    %763 = vst.msk [vmem:[#allocation8] sm:$0xff] %vm762, %v758
    %764 = vst.msk [vmem:[#allocation8 + $0x8] sm:$0xff] %vm762, %v759
    %765 = vst.msk [vmem:[#allocation8 + $0x10] sm:$0xff] %vm762, %v760
    %766 = vst.msk [vmem:[#allocation8 + $0x18] sm:$0xff] %vm762, %v761
    // Predicated region
    $region22: #{tpu_custom_call.1} parent=1 // pred_check
      _
    $region23: #{tpu_custom_call.1} parent=1 // pred_check_branch
      %768 = sbr.rel (0) target = $region25
    $region24: #{tpu_custom_call.1} parent=1 // pred_region
      %s770 = ssub.s32 32, 32
      %771 = vsyncadd [#allocation4], %s770
      %s773 = sshll.u32 [#allocation7], 4
      %s774 = int_to_ptr.vmem [resolvable:$true] %s773
      %776 = dma.vmem_to_hbm [thread:$0]  %s774, 32, %s2, [#allocation4]
    $region25: #{tpu_custom_call.1} parent=1 // pred_fallthru
      _
    // Predicated region
    $region26: #{tpu_custom_call.1} parent=1 // pred_check
      _
    $region27: #{tpu_custom_call.1} parent=1 // pred_check_branch
      %778 = sbr.rel (0) target = $region29
    $region28: #{tpu_custom_call.1} parent=1 // pred_region
      %s780 = ssub.s32 512, 512
      %781 = vsyncadd [#allocation9], %s780
      %s782 = sshll.u32 [#allocation8], 4
      %s783 = int_to_ptr.vmem [resolvable:$true] %s782
      %788 = dma.vmem_to_hbm [thread:$0]  %s783, 512, %s3, [#allocation9], 128, 128, 8
    $region29: #{tpu_custom_call.1} parent=1 // pred_fallthru
      _
    // Predicated region
    $region30: #{tpu_custom_call.1} parent=1 // pred_check
      _
    $region31: #{tpu_custom_call.1} parent=1 // pred_check_branch
      %790 = sbr.rel (0) target = $region33
    $region32: #{tpu_custom_call.1} parent=1 // pred_region
      %791 = dma.done [#allocation4], 32
    $region33: #{tpu_custom_call.1} parent=1 // pred_fallthru
      _
    // Predicated region
    $region34: #{tpu_custom_call.1} parent=1 // pred_check
      _
    $region35: #{tpu_custom_call.1} parent=1 // pred_check_branch
      %793 = sbr.rel (0) target = $region37
    $region36: #{tpu_custom_call.1} parent=1 // pred_region
      %794 = dma.done [#allocation9], 512
    $region37: #{tpu_custom_call.1} parent=1 // pred_fallthru
      _
    %795 = vsyncpa [#allocation3], 1
    %796 = vsyncpa [#allocation6], 1
    %797 = vsyncpa [#allocation4], 1
    %798 = vsyncpa [#allocation9], 1

</llo_original>
